<compile_context>
chip_gen: v6e
topology: v6e:2x2x1
jax: 0.10.0
libtpu: 0.0.40
codegen_flags: <defaults>
</compile_context>

<pallas_src>
import jax
import jax.numpy as jnp
from jax.experimental import pallas as pl
from jax.experimental.pallas import tpu as pltpu


# --------------------------------------------------------------------------
# Small helpers
# --------------------------------------------------------------------------
def _round_up(x, m):
    return (x + m - 1) // m * m


def _vmem_capacity_bytes():
    """Per-core VMEM capacity, generation-aware, with conservative fallback."""
    try:
        info = pltpu.get_tpu_info()
        for attr in ("vmem_capacity_bytes", "vmem_bytes", "vmem_size_bytes"):
            v = getattr(info, attr, None)
            if v:
                return int(v)
    except Exception:
        pass
    try:
        kind = jax.devices()[0].device_kind.lower()
    except Exception:
        kind = ""
    if "v5" in kind or "v6" in kind:
        return 128 * 1024 * 1024          # v5e / v6e: 128 MiB VMEM
    return 64 * 1024 * 1024               # v7x-safe conservative default


def _has_native_bf16_vpu():
    """bf16 elementwise is native on v6e / v7x; emulated (slow) on v5e."""
    try:
        kind = jax.devices()[0].device_kind.lower()
    except Exception:
        return False
    return any(tag in kind for tag in ("v6", "v7", "7x"))


def _footprint_bytes(th, W2, Cin, C2, Cout_pad, x_item, cd_item, ew_item,
                     emit_cast):
    """Conservative per-grid-step VMEM footprint (max over the two passes),
    including double-buffered pipeline tiles AND in-kernel f32 temporaries."""
    th2 = th // 2
    tile = th * W2 * C2
    # Stats pass: double-buffered input + f32 upcast & x*x temporaries
    # (+ double-buffered compute-dtype copy when emitted).
    stats = 2 * tile * x_item + 2 * tile * 4
    if emit_cast:
        stats += 2 * tile * cd_item
    # Main pass.
    main = 2 * tile * cd_item                        # input tiles (dbl-buffered)
    main += 2 * th2 * W2 * Cout_pad * 4              # output tiles (dbl-buffered)
    main += 2 * tile * ew_item                       # y (+ elementwise upcast)
    main += th * W2 * Cin * ew_item                  # yw (W-pooled)
    main += th2 * W2 * Cin * max(ew_item, cd_item)   # pooled acts
    main += th2 * W2 * Cout_pad * 4                  # f32 matmul result
    main += Cin * Cout_pad * cd_item                 # weight (single-buffered)
    return max(stats, main)


def _choose_row_tile(N, H, W, Cin, Cout_pad, *, x_item, cd_item, ew_item,
                     emit_cast, budget_bytes):
    W2, C2 = W // 2, 2 * Cin

    def aligned(th):
        # Flattened output block sublane dim must be a multiple of 8 (or the
        # block must cover the full extent) so stores stay relayout-free.
        return ((th // 2) * W2) % 8 == 0 or th == H

    fits = [th for th in range(2, H + 1, 2)
            if H % th == 0 and aligned(th)
            and _footprint_bytes(th, W2, Cin, C2, Cout_pad, x_item, cd_item,
                                 ew_item, emit_cast) <= budget_bytes]
    if not fits:
        return H          # full-height block is always layout-legal

    # Keep the grid deep enough to hide DMAs and feed both v7x TensorCores.
    min_steps = min(8, N * (H // min(fits)))
    deep = [th for th in fits if N * (H // th) >= min_steps]
    pool = deep or fits
    # Tie-break: prefer a matmul M dim that fills the 256-wide MXU.
    good_m = [th for th in pool
              if ((th // 2) * W2) % 256 == 0 and (th // 2) * W2 >= 512]
    return max(good_m or pool)


# --------------------------------------------------------------------------
# Pass 1: fused single-read BN batch statistics (+ optional compute-dtype copy)
# --------------------------------------------------------------------------
def _make_stats_kernel(emit_cast):
    def kernel(x_ref, sums_ref, *rest):
        # sums_ref: (1, 2, 2*Cin) per-batch partial sums, resident across the
        # "arbitrary" row axis (accumulator pattern).
        @pl.when(pl.program_id(1) == 0)
        def _init():
            sums_ref[...] = jnp.zeros_like(sums_ref)

        x = x_ref[0]                                  # (TH, W/2, 2*Cin)
        xf = x.astype(jnp.float32)
        c2 = xf.shape[-1]

        def _colsum(v):                               # (TH, W/2, C2) -> (1, C2)
            v = jnp.sum(v, axis=1, keepdims=True)     # sublane reduce (XLU)
            v = jnp.sum(v, axis=0, keepdims=True)     # outer-dim reduce
            return v.reshape(1, c2)

        sums_ref[0, 0:1, :] += _colsum(xf)            # E[x] partial
        sums_ref[0, 1:2, :] += _colsum(xf * xf)       # E[x^2] partial

        if emit_cast:
            xcast_ref = rest[0]
            xcast_ref[0] = x.astype(xcast_ref.dtype)  # fused bf16 copy of x
    return kernel


def _run_stats(x_v, th, emit_cast, compute_dtype, vmem_limit):
    N, H, W2, C2 = x_v.shape
    grid = (N, H // th)
    x_spec = pl.BlockSpec((1, th, W2, C2), lambda n, h: (n, h, 0, 0))
    sums_shape = jax.ShapeDtypeStruct((N, 2, C2), jnp.float32)
    sums_spec = pl.BlockSpec((1, 2, C2), lambda n, h: (n, 0, 0))

    bytes_accessed = x_v.size * x_v.dtype.itemsize + N * 2 * C2 * 4
    if emit_cast:
        out_shape = (sums_shape,
                     jax.ShapeDtypeStruct((N, H, W2, C2), compute_dtype))
        out_specs = (sums_spec,
                     pl.BlockSpec((1, th, W2, C2), lambda n, h: (n, h, 0, 0)))
        bytes_accessed += x_v.size * jnp.dtype(compute_dtype).itemsize
    else:
        out_shape = sums_shape
        out_specs = sums_spec

    res = pl.pallas_call(
        _make_stats_kernel(emit_cast),
        out_shape=out_shape,
        grid_spec=pltpu.PrefetchScalarGridSpec(
            num_scalar_prefetch=0,
            grid=grid,
            in_specs=[x_spec],
            out_specs=out_specs),
        compiler_params=pltpu.CompilerParams(
            dimension_semantics=("parallel", "arbitrary"),
            vmem_limit_bytes=vmem_limit),
        cost_estimate=pl.CostEstimate(flops=3 * x_v.size, transcendentals=0,
                                      bytes_accessed=int(bytes_accessed)),
    )(x_v)
    if emit_cast:
        return res[0], res[1]
    return res, None


# --------------------------------------------------------------------------
# Pass 2: folded-BN + ReLU + 2x2 avg pool + 1x1 conv
# --------------------------------------------------------------------------
def _make_transition_kernel(cin, ew_dtype, precision):
    def kernel(x_ref, scale_ref, shift_ref, w_ref, o_ref):
        x = x_ref[0].astype(ew_dtype)                 # (TH, W/2, 2*Cin)
        th, w2 = x.shape[0], x.shape[1]
        scale = scale_ref[0].astype(ew_dtype)         # (2*Cin,)
        shift = shift_ref[0].astype(ew_dtype)

        # Fused folded-BatchNorm + ReLU on the VPU.
        y = jnp.maximum(x * scale + shift, 0.0)

        # 2x2 average pool BEFORE the 1x1 conv (both linear -> exact).
        # W-pair add lives in lane space (wrapper folded W pairs into channels)
        # so there is no sublane-splitting reshape / relayout.
        yw = y[..., :cin] + y[..., cin:]                    # (TH, W/2, Cin)
        # H-pair add: split the leading (outer) axis only.
        y4 = yw.reshape(th // 2, 2, w2, cin)
        yp = (y4[:, 0] + y4[:, 1]) * 0.25                   # (TH/2, W/2, Cin)

        acts = yp.reshape((th // 2) * w2, cin).astype(w_ref.dtype)
        # 1x1 conv == channel matmul on the MXU, f32 accumulation.
        out = jnp.dot(acts, w_ref[...], preferred_element_type=jnp.float32,
                      precision=precision)
        o_ref[0] = out.astype(o_ref.dtype)                  # lane-dense store
    return kernel


def _run_main(x_main, scale2d, shift2d, w_mat, *, th, cin, cout_pad, out_dtype,
              ew_dtype, precision, vmem_limit, single_buffer):
    N, H, W2, C2 = x_main.shape
    th2 = th // 2
    grid = (N, H // th)

    inv_kw = {}
    if single_buffer and hasattr(pl, "Buffered"):
        # Grid-invariant operands only need one VMEM buffer (saves
        # Cin*Cout_pad*itemsize of VMEM — matters under v7x's 64 MiB).
        inv_kw = dict(pipeline_mode=pl.Buffered(buffer_count=1))

    m_rows = (H // 2) * W2
    flops = 2 * N * m_rows * cin * cout_pad + 4 * N * H * W2 * C2
    bytes_accessed = (x_main.size * x_main.dtype.itemsize
                      + w_mat.size * w_mat.dtype.itemsize
                      + N * m_rows * cout_pad * jnp.dtype(out_dtype).itemsize)

    return pl.pallas_call(
        _make_transition_kernel(cin, ew_dtype, precision),
        out_shape=jax.ShapeDtypeStruct((N, m_rows, cout_pad), out_dtype),
        grid_spec=pltpu.PrefetchScalarGridSpec(
            num_scalar_prefetch=0,
            grid=grid,
            in_specs=[
                pl.BlockSpec((1, th, W2, C2), lambda n, h: (n, h, 0, 0)),
                pl.BlockSpec((1, C2), lambda n, h: (0, 0), **inv_kw),
                pl.BlockSpec((1, C2), lambda n, h: (0, 0), **inv_kw),
                pl.BlockSpec((cin, cout_pad), lambda n, h: (0, 0), **inv_kw),
            ],
            out_specs=pl.BlockSpec((1, th2 * W2, cout_pad),
                                   lambda n, h: (n, h, 0)),
        ),
        compiler_params=pltpu.CompilerParams(
            dimension_semantics=("parallel", "parallel"),
            vmem_limit_bytes=vmem_limit),
        cost_estimate=pl.CostEstimate(flops=int(flops), transcendentals=0,
                                      bytes_accessed=int(bytes_accessed)),
    )(x_main, scale2d, shift2d, w_mat)


# --------------------------------------------------------------------------
# Wrappers
# --------------------------------------------------------------------------
def transition_forward_nhwc(x_nhwc, gamma, beta, conv_w, *, eps=1e-5,
                            compute_dtype=jnp.float32, elementwise_dtype=None,
                            out_dtype=None, row_tile=None, precision=None):
    """NHWC core (no layout transposes): (N, H, W, Cin) -> (N, H//2, W//2, Cout)."""
    N, H, W, Cin = x_nhwc.shape
    Cout = conv_w.shape[0]
    assert H % 2 == 0 and W % 2 == 0, (H, W)
    x_dtype = jnp.dtype(x_nhwc.dtype)
    compute_dtype = jnp.dtype(compute_dtype)
    out_dtype = x_dtype if out_dtype is None else jnp.dtype(out_dtype)

    if elementwise_dtype is None:
        if compute_dtype == jnp.bfloat16 and _has_native_bf16_vpu():
            elementwise_dtype = jnp.bfloat16       # v6e / v7x: native bf16 VPU
        else:
            elementwise_dtype = jnp.float32        # v5e: keep f32 elementwise
    elementwise_dtype = jnp.dtype(elementwise_dtype)

    W2, C2 = W // 2, 2 * Cin
    # Free (contiguous) HBM view: fold W pairs into the lane/channel axis.
    x_v = x_nhwc.reshape(N, H, W2, C2)

    # 1x1 conv weight as channel matmul; Cout padded to 128 for lane-dense
    # output stores (padding sliced off below).
    Cout_pad = _round_up(Cout, 128)
    w_mat = conv_w.reshape(Cout, Cin).T.astype(compute_dtype)
    if Cout_pad != Cout:
        w_mat = jnp.pad(w_mat, ((0, 0), (0, Cout_pad - Cout)))

    emit_cast = compute_dtype != x_dtype

    vmem_cap = _vmem_capacity_bytes()
    vmem_limit = min(vmem_cap * 3 // 4, 96 * 1024 * 1024)        # 48 MiB on v7x
    budget = min(max(vmem_limit // 2, 16 * 1024 * 1024), 64 * 1024 * 1024)

    th = row_tile if row_tile is not None else _choose_row_tile(
        N, H, W, Cin, Cout_pad,
        x_item=x_dtype.itemsize, cd_item=compute_dtype.itemsize,
        ew_item=elementwise_dtype.itemsize, emit_cast=emit_cast,
        budget_bytes=budget)
    assert H % th == 0 and th % 2 == 0, (H, th)
    assert ((th // 2) * W2) % 8 == 0 or th == H, (
        "row_tile must make the output block sublane dim a multiple of 8")

    # ---- Pass 1: single read of x -> BN batch stats (+ optional cast). ----
    # TODO(synk): running_mean/running_var buffer updates of nn.BatchNorm2d are
    # not emitted (forward-only semantics).
    partial_sums, x_cast = _run_stats(x_v, th, emit_cast, compute_dtype,
                                      vmem_limit)
    x_main = x_cast if emit_cast else x_v

    sums = partial_sums.sum(axis=0)                         # (2, 2*Cin)
    count = N * H * W
    s1 = (sums[0, :Cin] + sums[0, Cin:]) / count            # E[x]
    s2 = (sums[1, :Cin] + sums[1, Cin:]) / count            # E[x^2]
    # One-pass variance; guarded against tiny negative values. (Slightly
    # cancellation-prone vs PyTorch's two-pass variance for large-mean inputs.)
    var = jnp.maximum(s2 - s1 * s1, 0.0)
    scale = gamma.astype(jnp.float32) / jnp.sqrt(var + eps)
    shift = beta.astype(jnp.float32) - s1 * scale
    scale2d = jnp.concatenate([scale, scale]).reshape(1, C2)
    shift2d = jnp.concatenate([shift, shift]).reshape(1, C2)

    # ---- Pass 2: BN + ReLU + 2x2 avg pool + 1x1 conv. ----
    kwargs = dict(th=th, cin=Cin, cout_pad=Cout_pad, out_dtype=out_dtype,
                  ew_dtype=elementwise_dtype, precision=precision,
                  vmem_limit=vmem_limit)
    try:
        out_flat = _run_main(x_main, scale2d, shift2d, w_mat,
                             single_buffer=True, **kwargs)
    except Exception:
        # pl.Buffered(1) unsupported on this jax version -> default buffering.
        out_flat = _run_main(x_main, scale2d, shift2d, w_mat,
                             single_buffer=False, **kwargs)

    out_nhwc = out_flat.reshape(N, H // 2, W2, Cout_pad)
    if Cout_pad != Cout:
        # TODO(synk): keep the padded channel dim (or fuse this slice into the
        # consumer) to avoid an extra HBM read+write of the result.
        out_nhwc = out_nhwc[..., :Cout]
    return out_nhwc


def transition_forward(x_nchw, gamma, beta, conv_w, *, eps=1e-5,
                       compute_dtype=jnp.float32, row_tile=None, **kwargs):
    """PyTorch-layout interface: (N, Cin, H, W) -> (N, Cout, H//2, W//2)."""
    # TODO(synk): if the surrounding model is channels-last, call
    # transition_forward_nhwc directly — these two full-HBM transposes cost
    # more bandwidth than the kernel itself.
    x_nhwc = jnp.transpose(x_nchw, (0, 2, 3, 1))
    out_nhwc = transition_forward_nhwc(x_nhwc, gamma, beta, conv_w, eps=eps,
                                       compute_dtype=compute_dtype,
                                       row_tile=row_tile, **kwargs)
    return jnp.transpose(out_nhwc, (0, 3, 1, 2))


# --------------------------------------------------------------------------
# Pure-JAX reference + self-test
# --------------------------------------------------------------------------
def _reference(x_nchw, gamma, beta, conv_w, eps=1e-5):
    """Mirrors the PyTorch forward (training-mode BN batch statistics)."""
    mean = jnp.mean(x_nchw, axis=(0, 2, 3), keepdims=True)
    var = jnp.mean((x_nchw - mean) ** 2, axis=(0, 2, 3), keepdims=True)
    xn = (x_nchw - mean) / jnp.sqrt(var + eps)
    xn = xn * gamma.reshape(1, -1, 1, 1) + beta.reshape(1, -1, 1, 1)
    y = jnp.maximum(xn, 0.0)
    out = jnp.einsum('nchw,oc->nohw', y, conv_w.reshape(conv_w.shape[0], -1))
    N, C, H, W = out.shape
    out = out.reshape(N, C, H // 2, 2, W // 2, 2).mean(axis=(3, 5))
    return out


if __name__ == "__main__":
    key = jax.random.PRNGKey(0)
    k_x, k_g, k_b, k_w = jax.random.split(key, 4)

    N, in_planes, out_planes, H, W = 2, 4, 2, 16, 16

    x = jax.random.normal(k_x, (N, in_planes, H, W), dtype=jnp.float32)
    gamma = 1.0 + 0.1 * jax.random.normal(k_g, (in_planes,), dtype=jnp.float32)
    beta = 0.1 * jax.random.normal(k_b, (in_planes,), dtype=jnp.float32)
    conv_w = 0.5 * jax.random.normal(
        k_w, (out_planes, in_planes, 1, 1), dtype=jnp.float32)

    ref = _reference(x, gamma, beta, conv_w)

    # f32 path, auto-chosen row tile (>= 8 grid steps for pipelining).
    out = jax.block_until_ready(transition_forward(x, gamma, beta, conv_w))
    assert out.shape == (N, out_planes, H // 2, W // 2), out.shape
    assert jnp.allclose(out, ref, atol=1e-4, rtol=1e-4), "f32 mismatch vs ref"

    # bf16-matmul path with explicit row tiling (exercises the fused
    # stats+cast pass and the bf16 operand route).
    out_bf16 = jax.block_until_ready(
        transition_forward(x, gamma, beta, conv_w,
                           compute_dtype=jnp.bfloat16, row_tile=8))
    assert out_bf16.shape == out.shape
    assert jnp.allclose(out_bf16, ref, atol=5e-2, rtol=5e-2), \
        "bf16 mismatch vs ref"

    print("KERNEL_OK")
</pallas_src>

<mosaic_0001>
module attributes {stable_mosaic.version = 11 : i64} {
  func.func @kernel(%arg0: i32, %arg1: i32, %arg2: memref<1x4x8x8xf32, #tpu.memory_space<vmem>>, %arg3: memref<1x2x8xf32, #tpu.memory_space<vmem>>) attributes {dimension_semantics = [#tpu.dimension_semantics<parallel>, #tpu.dimension_semantics<arbitrary>], iteration_bounds = array<i64: 2, 4>, scalar_prefetch = 0 : i64, scratch_operands = 0 : i64, tpu.core_type = #tpu.core_type<tc>, window_params = [{transform_indices = @transform_0, window_bounds = array<i64: 1, 4, 8, 8>}, {transform_indices = @transform_1, window_bounds = array<i64: 1, 2, 8>}]} {
    %c0_i32 = arith.constant 0 : i32
    %0 = arith.cmpi eq, %arg1, %c0_i32 : i32
    %1 = arith.extui %0 : i1 to i32
    %c0_i32_0 = arith.constant 0 : i32
    %2 = arith.cmpi ne, %1, %c0_i32_0 : i32
    scf.if %2 {
      %cst_18 = arith.constant 0.000000e+00 : f32
      %28 = vector.broadcast %cst_18 : f32 to vector<1x2x8xf32>
      %c0_19 = arith.constant 0 : index
      %c0_20 = arith.constant 0 : index
      %c0_21 = arith.constant 0 : index
      %29 = vector.load %arg3[%c0_19, %c0_20, %c0_21] : memref<1x2x8xf32, #tpu.memory_space<vmem>>, vector<1x2x8xf32>
      tpu.vector_store %arg3[%c0_19, %c0_20, %c0_21], %28 {strides = array<i32>} : memref<1x2x8xf32, #tpu.memory_space<vmem>>, vector<1x2x8xf32>,
    } else {
    }
    %c0 = arith.constant 0 : index
    %c0_1 = arith.constant 0 : index
    %c0_2 = arith.constant 0 : index
    %c0_3 = arith.constant 0 : index
    %3 = vector.load %arg2[%c0, %c0_1, %c0_2, %c0_3] : memref<1x4x8x8xf32, #tpu.memory_space<vmem>>, vector<1x4x8x8xf32>
    %4 = vector.shape_cast %3 : vector<1x4x8x8xf32> to vector<4x8x8xf32>
    %c0_4 = arith.constant 0 : index
    %c0_5 = arith.constant 0 : index
    %c0_6 = arith.constant 0 : index
    %5 = vector.load %arg3[%c0_4, %c0_5, %c0_6] : memref<1x2x8xf32, #tpu.memory_space<vmem>>, vector<1x1x8xf32>
    %6 = vector.shape_cast %5 : vector<1x1x8xf32> to vector<1x8xf32>
    %cst = arith.constant dense<0.000000e+00> : vector<4x8xf32>
    %7 = vector.multi_reduction <add>, %4, %cst [1] : vector<4x8x8xf32> to vector<4x8xf32>
    %8 = vector.shape_cast %7 : vector<4x8xf32> to vector<4x1x8xf32>
    %cst_7 = arith.constant dense<0.000000e+00> : vector<1x8xf32>
    %9 = vector.multi_reduction <add>, %8, %cst_7 [0] : vector<4x1x8xf32> to vector<1x8xf32>
    %10 = vector.shape_cast %9 : vector<1x8xf32> to vector<1x1x8xf32>
    %11 = vector.shape_cast %10 : vector<1x1x8xf32> to vector<1x8xf32>
    %12 = arith.addf %6, %11 : vector<1x8xf32>
    %c0_8 = arith.constant 0 : index
    %c0_9 = arith.constant 0 : index
    %c0_10 = arith.constant 0 : index
    %13 = vector.load %arg3[%c0_8, %c0_9, %c0_10] : memref<1x2x8xf32, #tpu.memory_space<vmem>>, vector<1x1x8xf32>
    %14 = vector.shape_cast %13 : vector<1x1x8xf32> to vector<1x8xf32>
    %15 = vector.shape_cast %12 : vector<1x8xf32> to vector<1x1x8xf32>
    tpu.vector_store %arg3[%c0_8, %c0_9, %c0_10], %15 {strides = array<i32>} : memref<1x2x8xf32, #tpu.memory_space<vmem>>, vector<1x1x8xf32>,
    %c0_11 = arith.constant 0 : index
    %c1 = arith.constant 1 : index
    %c0_12 = arith.constant 0 : index
    %16 = vector.load %arg3[%c0_11, %c1, %c0_12] : memref<1x2x8xf32, #tpu.memory_space<vmem>>, vector<1x1x8xf32>
    %17 = vector.shape_cast %16 : vector<1x1x8xf32> to vector<1x8xf32>
    %18 = arith.mulf %4, %4 : vector<4x8x8xf32>
    %cst_13 = arith.constant dense<0.000000e+00> : vector<4x8xf32>
    %19 = vector.multi_reduction <add>, %18, %cst_13 [1] : vector<4x8x8xf32> to vector<4x8xf32>
    %20 = vector.shape_cast %19 : vector<4x8xf32> to vector<4x1x8xf32>
    %cst_14 = arith.constant dense<0.000000e+00> : vector<1x8xf32>
    %21 = vector.multi_reduction <add>, %20, %cst_14 [0] : vector<4x1x8xf32> to vector<1x8xf32>
    %22 = vector.shape_cast %21 : vector<1x8xf32> to vector<1x1x8xf32>
    %23 = vector.shape_cast %22 : vector<1x1x8xf32> to vector<1x8xf32>
    %24 = arith.addf %17, %23 : vector<1x8xf32>
    %c0_15 = arith.constant 0 : index
    %c1_16 = arith.constant 1 : index
    %c0_17 = arith.constant 0 : index
    %25 = vector.load %arg3[%c0_15, %c1_16, %c0_17] : memref<1x2x8xf32, #tpu.memory_space<vmem>>, vector<1x1x8xf32>
    %26 = vector.shape_cast %25 : vector<1x1x8xf32> to vector<1x8xf32>
    %27 = vector.shape_cast %24 : vector<1x8xf32> to vector<1x1x8xf32>
    tpu.vector_store %arg3[%c0_15, %c1_16, %c0_17], %27 {strides = array<i32>} : memref<1x2x8xf32, #tpu.memory_space<vmem>>, vector<1x1x8xf32>,
    return
  }
  func.func @transform_0(%arg0: i32, %arg1: i32) -> (i32, i32, i32, i32) {
    %c0_i32 = arith.constant 0 : i32
    %c0_i32_0 = arith.constant 0 : i32
    %c0_i32_1 = arith.constant 0 : i32
    return %arg0, %arg1, %c0_i32, %c0_i32_0 : i32, i32, i32, i32
  }
  func.func @transform_1(%arg0: i32, %arg1: i32) -> (i32, i32, i32) {
    %c0_i32 = arith.constant 0 : i32
    %c0_i32_0 = arith.constant 0 : i32
    %c0_i32_1 = arith.constant 0 : i32
    return %arg0, %c0_i32, %c0_i32_0 : i32, i32, i32
  }
}

</mosaic_0001>

<llo_original>
// kernel: tpu_custom_call.1
$region0: #{tpu_custom_call.1}
  #allocation0 [shape = 'u32[]', space=smem, size = 0x4, offset = 0x4, fixed_abs, tag = 'smem constant byte address 0x4 - core index']
  #allocation1 [shape = 'u32[144,128]{1,0:T(1,128)}', space=vmem, size = 0x12000, scoped, tag = 'internal scratch']
  %s0 = inlined_call_operand.vmem [shape: f32[2,16,8,8], index: 0, kind: input, shape index: {}]
  %s1 = inlined_call_operand.hbm [shape: f32[2,2,8], index: 1, kind: output, shape index: {}]
  %s2 = sld [smem:[#allocation0]]
  $region41: #{tpu_custom_call.1} parent=0
    _
  %s4 = ssub.s32 1, %s2
  %s5 = scalar_select 0, %s4, %s2
  $region1: #{tpu_custom_call.1} parent=0
    #allocation2 [shape = 'u8[2048]{0}', space=vmem, size = 0x800, scoped, tag = 'output window, operand 0']
    #allocation3 [shape = 's32[2]{0}', space=sflag, size = 0x8, scoped, tag = 'scoped memory for tpu_custom_call.1']
    %6 = vsyncpa [#allocation3], 0
    %s7 = scalar_lea.sflag [#allocation3], 1
    %8 = vsyncpa %s7, 0
    loop: start=0, step=1, limit=10
    $region2: #{tpu_custom_call.1} parent=1 // loop_pre_header
      _
    $region3: #{tpu_custom_call.1} parent=1 // loop_header
      %s10 = sphi 0, %s14
      %p11 = scmp.ge.s32.totalorder %s10, 10
      %s17 = sphi 0, %s29
      %s18 = sphi 0, %s25
      %s19 = sphi 0, %s17
      %s20 = sphi 0, %s18
      %s21 = sphi 0, %s19
      %s22 = sphi 0, %s20
      %s34 = sphi 0, %s36
      %s37 = sphi 0, %s34
      %s38 = sphi 0, %s37
      %s54 = sphi 0, %s38
      %s60 = sphi 0, %s62
      %s63 = sphi 0, %s60
      %s64 = sphi 0, %s63
      %s80 = sphi 0, %s64
    $region4: #{tpu_custom_call.1} parent=1 // loop_header_branch
      %13 = sbr.rel (%p11) target = $region8
    $region5: #{tpu_custom_call.1} parent=1 // loop_body
      %s15 = ssub.s32 %s10, 1
      %s16 = ssub.s32 %s10, 2
      %s23 = sadd.s32 1, %s18
      %p24 = scmp.ge.s32.totalorder %s23, 4
      %s25 = scalar_select %p24, 0, %s23
      %s26 = sadd.s32 1, %s17
      %s27 = scalar_select %p24, %s26, %s17
      %p28 = scmp.ge.s32.totalorder %s27, 2
      %s29 = scalar_select %p28, 0, %s27
      %s30 = ssub.s32 %s17, %s29
      %s31 = ssub.s32 %s18, %s25
      %s32 = sor.u32 %s30, %s31
      %p33 = scmp.eq.s32.totalorder %s32, 0
      %s35 = sadd.s32 %s34, 1
      %s36 = scalar_select %p33, %s34, %s35
      %p39 = pneg %p33
      %p40 = scmp.eq.s32.totalorder %s10, 7
      %p41 = por %p39, %p40
      %p42 = scmp.ne.s32.totalorder %s34, %s37
      %p43 = scmp.eq.s32.totalorder %s10, 0
      %p44 = por %p42, %p43
      %p45 = scmp.ne.s32.totalorder %s34, %s37
      %p46 = scmp.eq.s32.totalorder %s15, 7
      %p47 = por %p45, %p46
      %p48 = scmp.ne.s32.totalorder %s37, %s38
      %p49 = scmp.eq.s32.totalorder %s15, 0
      %p50 = por %p48, %p49
      %p51 = scmp.ne.s32.totalorder %s37, %s38
      %p52 = scmp.eq.s32.totalorder %s16, 7
      %p53 = por %p51, %p52
      %p55 = scmp.ne.s32.totalorder %s38, %s54
      %p56 = scmp.eq.s32.totalorder %s16, 0
      %p57 = por %p55, %p56
      %s58 = ssub.s32 %s17, %s29
      %p59 = scmp.eq.s32.totalorder %s58, 0
      %s61 = sadd.s32 %s60, 1
      %s62 = scalar_select %p59, %s60, %s61
      %p65 = pneg %p59
      %p66 = scmp.eq.s32.totalorder %s10, 7
      %p67 = por %p65, %p66
      %p68 = scmp.ne.s32.totalorder %s60, %s63
      %p69 = scmp.eq.s32.totalorder %s10, 0
      %p70 = por %p68, %p69
      %p71 = scmp.ne.s32.totalorder %s60, %s63
      %p72 = scmp.eq.s32.totalorder %s15, 7
      %p73 = por %p71, %p72
      %p74 = scmp.ne.s32.totalorder %s63, %s64
      %p75 = scmp.eq.s32.totalorder %s15, 0
      %p76 = por %p74, %p75
      %p77 = scmp.ne.s32.totalorder %s63, %s64
      %p78 = scmp.eq.s32.totalorder %s16, 7
      %p79 = por %p77, %p78
      %p81 = scmp.ne.s32.totalorder %s64, %s80
      %p82 = scmp.eq.s32.totalorder %s16, 0
      %p83 = por %p81, %p82
      %p84 = scmp.le.s32.totalorder 1, %s10
      %p85 = scmp.lt.s32.totalorder %s10, 9
      %p86 = pnand %p84, %p85
      %p87 = pneg %p86
      // Predicated region
      $region9: #{tpu_custom_call.1} parent=5 // pred_check
        _
      $region10: #{tpu_custom_call.1} parent=5 // pred_check_branch
        %89 = sbr.rel (%p86) target = $region12
      $region11: #{tpu_custom_call.1} parent=5 // pred_region
        %s90 = ssub.s32 %s10, 1
      $region12: #{tpu_custom_call.1} parent=5 // pred_fallthru
        _
      %p91 = scmp.lt.s32.totalorder %s10, 8
      // Predicated region
      $region13: #{tpu_custom_call.1} parent=5 // pred_check
        %p92 = pneg %p91
      $region14: #{tpu_custom_call.1} parent=5 // pred_check_branch
        %94 = sbr.rel (%p92) target = $region16
      $region15: #{tpu_custom_call.1} parent=5 // pred_region
        // Predicated region
        $region17: #{tpu_custom_call.1} parent=15 // pred_check
          %p95 = pneg %p44
        $region18: #{tpu_custom_call.1} parent=15 // pred_check_branch
          %97 = sbr.rel (%p95) target = $region20
        $region19: #{tpu_custom_call.1} parent=15 // pred_region
          %s98 = smul.u32 4, %s18
          %p99 = scmp.lt.s32.totalorder %s17, 1
          %s100 = scalar_select %p99, %s17, 1
          %p101 = scmp.lt.s32.totalorder %s98, 15
          %s102 = scalar_select %p101, %s98, 15
          %s103 = smul.addr %s100, 16
          %s104 = sadd.s32 %s102, %s103
          %s105 = smul.addr %s104, 8
          %s106 = scalar_lea.vmem %s0, %s105
          %s107 = smul.u32 4, %s18
        $region20: #{tpu_custom_call.1} parent=15 // pred_fallthru
          _
      $region16: #{tpu_custom_call.1} parent=5 // pred_fallthru
        _
      %p108 = scmp.le.s32.totalorder 1, %s10
      %p109 = scmp.lt.s32.totalorder %s10, 9
      %p110 = pnand %p108, %p109
      %p111 = pneg %p110
      // Predicated region
      $region21: #{tpu_custom_call.1} parent=5 // pred_check
        _
      $region22: #{tpu_custom_call.1} parent=5 // pred_check_branch
        %113 = sbr.rel (%p110) target = $region24
      $region23: #{tpu_custom_call.1} parent=5 // pred_region
        %s114 = ssub.s32 %s10, 1
        %s115 = smul.u32 4, %s20
        %p116 = scmp.lt.s32.totalorder %s19, 1
        %s117 = scalar_select %p116, %s19, 1
        %p118 = scmp.lt.s32.totalorder %s115, 15
        %s119 = scalar_select %p118, %s115, 15
        %s120 = smul.addr %s117, 16
        %s121 = sadd.s32 %s119, %s120
        %s122 = smul.addr %s121, 8
        %s123 = scalar_lea.vmem %s0, %s122
        %p124 = pneg %p50
        %p125 = pneg %p47
        %p126 = pneg %p76
        %p127 = pneg %p73
        %s128 = sand.u32 %s63, 1
        %s129 = scalar_lea.sflag [#allocation3], %s128
        %s130 = sand.u32 %s63, 1
        %s131 = smul.addr %s130, 2
        %s132 = scalar_lea.vmem [#allocation2], %s131
        %s133 = smul.u32 4, %s20
        %p134 = scmp.lt.s32.totalorder %s19, 1
        %s135 = scalar_select %p134, %s19, 1
        %p136 = scmp.lt.s32.totalorder %s133, 15
        %s137 = scalar_select %p136, %s133, 15
        %s138 = smul.addr %s135, 16
        %s139 = sadd.s32 %s137, %s138
        %s140 = smul.addr %s139, 8
        %s141 = scalar_lea.vmem %s0, %s140
        %s142 = smul.u32 4, %s20
        %p143 = scmp.eq.s32.totalorder %s20, 0
        // Predicated region
        $region25: #{tpu_custom_call.1} parent=23 // pred_check
          %p144 = pneg %p143
        $region26: #{tpu_custom_call.1} parent=23 // pred_check_branch
          %146 = sbr.rel (%p144) target = $region28
        $region27: #{tpu_custom_call.1} parent=23 // pred_region
          %vm147 = vcmask 58368
          %148 = vst.msk [vmem:[%s132] sm:$0x3] %vm147, 0.0
        $region28: #{tpu_custom_call.1} parent=23 // pred_fallthru
          _
        %v149 = vld [vmem:[%s141] sm:$0xff]
        %v150 = vld [vmem:[%s141 + $0x8] sm:$0xff]
        %v151 = vld [vmem:[%s141 + $0x10] sm:$0xff]
        %v152 = vld [vmem:[%s141 + $0x18] sm:$0xff]
        %v153 = vld [vmem:[%s132] sm:$0x1]
        %vm154 = vcmask 64512
        %v155 = vsel %vm154, %v149, 0.0
        %v156 = vrot.slane %v155, 4
        %v157 = vadd.f32 %v155, %v156
        %v158 = vrot.slane %v157, 2
        %v159 = vadd.f32 %v157, %v158
        %v160 = vrot.slane %v159, 1
        %v161 = vadd.f32 %v159, %v160
        %v162 = vsel %vm154, %v150, 0.0
        %v163 = vrot.slane %v162, 4
        %v164 = vadd.f32 %v162, %v163
        %v165 = vrot.slane %v164, 2
        %v166 = vadd.f32 %v164, %v165
        %v167 = vrot.slane %v166, 1
        %v168 = vadd.f32 %v166, %v167
        %v169 = vsel %vm154, %v151, 0.0
        %v170 = vrot.slane %v169, 4
        %v171 = vadd.f32 %v169, %v170
        %v172 = vrot.slane %v171, 2
        %v173 = vadd.f32 %v171, %v172
        %v174 = vrot.slane %v173, 1
        %v175 = vadd.f32 %v173, %v174
        %v176 = vsel %vm154, %v152, 0.0
        %v177 = vrot.slane %v176, 4
        %v178 = vadd.f32 %v176, %v177
        %v179 = vrot.slane %v178, 2
        %v180 = vadd.f32 %v178, %v179
        %v181 = vrot.slane %v180, 1
        %v182 = vadd.f32 %v180, %v181
        %v183 = vsel %vm154, %v161, 0.0
        %v184 = vsel %vm154, %v168, 0.0
        %v185 = vadd.f32 %v183, %v184
        %v186 = vsel %vm154, %v175, 0.0
        %v187 = vadd.f32 %v185, %v186
        %v188 = vsel %vm154, %v182, 0.0
        %v189 = vadd.f32 %v187, %v188
        %v190 = vadd.f32 %v153, %v189
        %vm191 = vcmask 57344
        %192 = vst.msk [vmem:[%s132] sm:$0x1] %vm191, %v190
        %v193 = vld [vmem:[%s132 + $0x1] sm:$0x1]
        %v194 = vmul.f32 %v149, %v149
        %v195 = vmul.f32 %v150, %v150
        %v196 = vmul.f32 %v151, %v151
        %v197 = vmul.f32 %v152, %v152
        %v198 = vsel %vm154, %v194, 0.0
        %v199 = vrot.slane %v198, 4
        %v200 = vadd.f32 %v198, %v199
        %v201 = vrot.slane %v200, 2
        %v202 = vadd.f32 %v200, %v201
        %v203 = vrot.slane %v202, 1
        %v204 = vadd.f32 %v202, %v203
        %v205 = vsel %vm154, %v195, 0.0
        %v206 = vrot.slane %v205, 4
        %v207 = vadd.f32 %v205, %v206
        %v208 = vrot.slane %v207, 2
        %v209 = vadd.f32 %v207, %v208
        %v210 = vrot.slane %v209, 1
        %v211 = vadd.f32 %v209, %v210
        %v212 = vsel %vm154, %v196, 0.0
        %v213 = vrot.slane %v212, 4
        %v214 = vadd.f32 %v212, %v213
        %v215 = vrot.slane %v214, 2
        %v216 = vadd.f32 %v214, %v215
        %v217 = vrot.slane %v216, 1
        %v218 = vadd.f32 %v216, %v217
        %v219 = vsel %vm154, %v197, 0.0
        %v220 = vrot.slane %v219, 4
        %v221 = vadd.f32 %v219, %v220
        %v222 = vrot.slane %v221, 2
        %v223 = vadd.f32 %v221, %v222
        %v224 = vrot.slane %v223, 1
        %v225 = vadd.f32 %v223, %v224
        %v226 = vsel %vm154, %v204, 0.0
        %v227 = vsel %vm154, %v211, 0.0
        %v228 = vadd.f32 %v226, %v227
        %v229 = vsel %vm154, %v218, 0.0
        %v230 = vadd.f32 %v228, %v229
        %v231 = vsel %vm154, %v225, 0.0
        %v232 = vadd.f32 %v230, %v231
        %v233 = vadd.f32 %v193, %v232
        %234 = vst.msk [vmem:[%s132 + $0x1] sm:$0x1] %vm191, %v233
        %s235 = sand.u32 %s63, 1
        %s236 = scalar_lea.sflag [#allocation3], %s235
        %s237 = sand.u32 %s63, 1
        %s238 = smul.addr %s237, 2
        %s239 = scalar_lea.vmem [#allocation2], %s238
        // Predicated region
        $region29: #{tpu_custom_call.1} parent=23 // pred_check
          %p240 = pneg %p73
        $region30: #{tpu_custom_call.1} parent=23 // pred_check_branch
          %242 = sbr.rel (%p240) target = $region32
        $region31: #{tpu_custom_call.1} parent=23 // pred_region
          %s244 = ssub.s32 32, 32
          %245 = vsyncadd %s236, %s244
          %s246 = smul.addr %s19, 32
          %s247 = scalar_lea.hbm %s1, %s246
          %s249 = sshll.u32 %s239, 4
          %s250 = int_to_ptr.vmem [resolvable:$true] %s249
          %252 = dma.vmem_to_hbm [thread:$0]  %s250, 32, %s247, %s236
        $region32: #{tpu_custom_call.1} parent=23 // pred_fallthru
          _
      $region24: #{tpu_custom_call.1} parent=5 // pred_fallthru
        _
      %p253 = scmp.le.s32.totalorder 2, %s10
      // Predicated region
      $region33: #{tpu_custom_call.1} parent=5 // pred_check
        %p254 = pneg %p253
      $region34: #{tpu_custom_call.1} parent=5 // pred_check_branch
        %256 = sbr.rel (%p254) target = $region36
      $region35: #{tpu_custom_call.1} parent=5 // pred_region
        %s257 = ssub.s32 %s10, 2
        // Predicated region
        $region37: #{tpu_custom_call.1} parent=35 // pred_check
          %p258 = pneg %p79
        $region38: #{tpu_custom_call.1} parent=35 // pred_check_branch
          %260 = sbr.rel (%p258) target = $region40
        $region39: #{tpu_custom_call.1} parent=35 // pred_region
          %s261 = sand.u32 %s64, 1
          %s262 = scalar_lea.sflag [#allocation3], %s261
          %s263 = sand.u32 %s64, 1
          %s264 = smul.addr %s263, 2
          %s265 = scalar_lea.vmem [#allocation2], %s264
          %266 = dma.done %s262, 32
        $region40: #{tpu_custom_call.1} parent=35 // pred_fallthru
          _
      $region36: #{tpu_custom_call.1} parent=5 // pred_fallthru
        _
    $region6: #{tpu_custom_call.1} parent=1 // loop_footer
      %s14 = sadd.s32 1, %s10
    $region7: #{tpu_custom_call.1} parent=1 // loop_footer_branch
      %9 = sbr.rel target = $region3
    $region8: #{tpu_custom_call.1} parent=1 // loop_exit
      _
    %267 = vsyncpa [#allocation3], 1
    %s268 = scalar_lea.sflag [#allocation3], 1
    %269 = vsyncpa %s268, 1

</llo_original>
